<compile_context>
chip_gen: v7x
topology: tpu7x:2x2x1
jax: 0.10.0
libtpu: 0.0.40
codegen_flags: <defaults>
</compile_context>

<pallas_src>
import jax
import jax.numpy as jnp
from jax.experimental import pallas as pl
from jax.experimental.pallas import tpu as pltpu

H1, H2 = 32, 64          # hidden sizes fixed by the PyTorch module


def _round_up(n, m):
    return ((n + m - 1) // m) * m


def actor_mlp_kernel(x_ref, w1_ref, w2_ref, w3_ref, b1_ref, b2_ref, b3_ref,
                     o_ref):
    # Layer 1: Linear(input_dim -> 32) + ReLU
    h = jnp.dot(x_ref[...], w1_ref[...], preferred_element_type=jnp.float32)
    h = jnp.maximum(h + b1_ref[...], 0.0)
    # Layer 2: Linear(32 -> 64) + ReLU
    h = jnp.dot(h, w2_ref[...], preferred_element_type=jnp.float32)
    h = jnp.maximum(h + b2_ref[...], 0.0)
    # Layer 3: Linear(64 -> out_dim) + tanh
    h = jnp.dot(h, w3_ref[...], preferred_element_type=jnp.float32)
    o_ref[...] = jnp.tanh(h + b3_ref[...]).astype(o_ref.dtype)


def actor_forward(x, params, *, block_b=1024):
    """x: (B, input_dim) float32. params: dict of W1,b1,W2,b2,W3,b3 (float32)."""
    B, D = x.shape
    out_dim = params["W3"].shape[1]

    # Batch tile: multiple of 8 sublanes, capped at block_b.  If the whole
    # batch fits in one tile but is big enough, split it so the grid has at
    # least 2 steps (pipeline overlap; dual-TC sharding headroom on v7x).
    TB = min(block_b, _round_up(B, 8))
    if B > 8 and pl.cdiv(B, TB) < 2:
        TB = max(8, _round_up(pl.cdiv(B, 2), 8))
    grid = (pl.cdiv(B, TB),)

    # Weights / biases: constant block index -> fetched once, stay in VMEM.
    def resident(a):
        return pl.BlockSpec(a.shape, lambda i: (0,) * a.ndim)

    weight_elems = (D * H1 + H1 * H2 + H2 * out_dim) + (H1 + H2 + out_dim)
    cost = pl.CostEstimate(
        flops=2 * B * (D * H1 + H1 * H2 + H2 * out_dim),
        transcendentals=B * out_dim,                       # tanh
        bytes_accessed=(B * D + B * out_dim + weight_elems) * 4,
    )

    # TODO(synk): on v7x, benchmark pltpu.CORE_PARALLEL on the batch axis vs
    # plain "parallel"; "parallel" is kept here as the safe default.
    out = pl.pallas_call(
        actor_mlp_kernel,
        out_shape=jax.ShapeDtypeStruct((B, out_dim), x.dtype),
        grid=grid,
        in_specs=[
            pl.BlockSpec((TB, D), lambda i: (i, 0)),       # x: tiled over batch
            resident(params["W1"]),
            resident(params["W2"]),
            resident(params["W3"]),
            resident(params["b1"]),
            resident(params["b2"]),
            resident(params["b3"]),
        ],
        out_specs=pl.BlockSpec((TB, out_dim), lambda i: (i, 0)),
        compiler_params=pltpu.CompilerParams(
            dimension_semantics=("parallel",)),
        cost_estimate=cost,
    )(x, params["W1"], params["W2"], params["W3"],
      params["b1"], params["b2"], params["b3"])

    return out


def init_actor_params(key, input_dim, output_dim):
    """Deterministic init mimicking PyTorch nn.Linear default:
    U(-1/sqrt(fan_in), 1/sqrt(fan_in)) for both weights and biases."""
    dims = [(input_dim, H1), (H1, H2), (H2, output_dim)]
    params = {}
    for i, (fan_in, fan_out) in enumerate(dims, start=1):
        key, kw, kb = jax.random.split(key, 3)
        bound = 1.0 / jnp.sqrt(float(fan_in))
        params[f"W{i}"] = jax.random.uniform(
            kw, (fan_in, fan_out), jnp.float32, minval=-bound, maxval=bound)
        params[f"b{i}"] = jax.random.uniform(
            kb, (1, fan_out), jnp.float32, minval=-bound, maxval=bound)
    return params


def actor_reference(x, params):
    """Pure-JAX f32 reference for correctness checking."""
    h = jnp.maximum(x @ params["W1"] + params["b1"], 0.0)
    h = jnp.maximum(h @ params["W2"] + params["b2"], 0.0)
    return jnp.tanh(h @ params["W3"] + params["b3"])


if __name__ == "__main__":
    key = jax.random.PRNGKey(0)
    batch, input_dim, output_dim = 2, 16, 8

    kx, kp = jax.random.split(key)
    x = jax.random.normal(kx, (batch, input_dim), jnp.float32)
    params = init_actor_params(kp, input_dim, output_dim)

    out = actor_forward(x, params)
    out = jax.block_until_ready(out)

    ref = actor_reference(x, params)
    assert out.shape == (batch, output_dim)
    # f32 end-to-end; tolerance covers MXU default-precision matmul rounding.
    assert jnp.allclose(out, ref, atol=1e-2, rtol=1e-2), "mismatch vs reference"

    print("KERNEL_OK")
</pallas_src>

<mosaic_0001>
module attributes {stable_mosaic.version = 11 : i64} {
  func.func @actor_mlp_kernel(%arg0: i32, %arg1: memref<8x16xf32, #tpu.memory_space<vmem>>, %arg2: memref<16x32xf32, #tpu.memory_space<vmem>>, %arg3: memref<32x64xf32, #tpu.memory_space<vmem>>, %arg4: memref<64x8xf32, #tpu.memory_space<vmem>>, %arg5: memref<1x32xf32, #tpu.memory_space<vmem>>, %arg6: memref<1x64xf32, #tpu.memory_space<vmem>>, %arg7: memref<1x8xf32, #tpu.memory_space<vmem>>, %arg8: memref<8x8xf32, #tpu.memory_space<vmem>>) attributes {dimension_semantics = [#tpu.dimension_semantics<parallel>], iteration_bounds = array<i64: 1>, scalar_prefetch = 0 : i64, scratch_operands = 0 : i64, tpu.core_type = #tpu.core_type<tc>, window_params = [{transform_indices = @transform_0, window_bounds = array<i64: 8, 16>}, {pipeline_mode = #tpu.pipeline_mode<synchronous>, transform_indices = @transform_1, window_bounds = array<i64: 16, 32>}, {pipeline_mode = #tpu.pipeline_mode<synchronous>, transform_indices = @transform_2, window_bounds = array<i64: 32, 64>}, {pipeline_mode = #tpu.pipeline_mode<synchronous>, transform_indices = @transform_3, window_bounds = array<i64: 64, 8>}, {pipeline_mode = #tpu.pipeline_mode<synchronous>, transform_indices = @transform_4, window_bounds = array<i64: 1, 32>}, {pipeline_mode = #tpu.pipeline_mode<synchronous>, transform_indices = @transform_5, window_bounds = array<i64: 1, 64>}, {pipeline_mode = #tpu.pipeline_mode<synchronous>, transform_indices = @transform_6, window_bounds = array<i64: 1, 8>}, {transform_indices = @transform_7, window_bounds = array<i64: 8, 8>}]} {
    %c0 = arith.constant 0 : index
    %c0_0 = arith.constant 0 : index
    %0 = vector.load %arg1[%c0, %c0_0] : memref<8x16xf32, #tpu.memory_space<vmem>>, vector<8x16xf32>
    %c0_1 = arith.constant 0 : index
    %c0_2 = arith.constant 0 : index
    %1 = vector.load %arg2[%c0_1, %c0_2] : memref<16x32xf32, #tpu.memory_space<vmem>>, vector<16x32xf32>
    %cst = arith.constant dense<0.000000e+00> : vector<8x32xf32>
    %2 = tpu.matmul %0, %1, %cst {dimension_numbers = #tpu.dot_dimension_numbers<[1], [0], [0], [1], [0, 0, 1, 1], [], []>} : vector<8x16xf32>, vector<16x32xf32>, vector<8x32xf32> -> vector<8x32xf32>
    %c0_3 = arith.constant 0 : index
    %c0_4 = arith.constant 0 : index
    %3 = vector.load %arg5[%c0_3, %c0_4] : memref<1x32xf32, #tpu.memory_space<vmem>>, vector<1x32xf32>
    %4 = vector.broadcast %3 : vector<1x32xf32> to vector<8x32xf32>
    %5 = arith.addf %2, %4 : vector<8x32xf32>
    %cst_5 = arith.constant 0.000000e+00 : f32
    %6 = vector.broadcast %cst_5 : f32 to vector<8x32xf32>
    %7 = arith.maximumf %5, %6 : vector<8x32xf32>
    %c0_6 = arith.constant 0 : index
    %c0_7 = arith.constant 0 : index
    %8 = vector.load %arg3[%c0_6, %c0_7] : memref<32x64xf32, #tpu.memory_space<vmem>>, vector<32x64xf32>
    %cst_8 = arith.constant dense<0.000000e+00> : vector<8x64xf32>
    %9 = tpu.matmul %7, %8, %cst_8 {dimension_numbers = #tpu.dot_dimension_numbers<[1], [0], [0], [1], [0, 0, 1, 1], [], []>} : vector<8x32xf32>, vector<32x64xf32>, vector<8x64xf32> -> vector<8x64xf32>
    %c0_9 = arith.constant 0 : index
    %c0_10 = arith.constant 0 : index
    %10 = vector.load %arg6[%c0_9, %c0_10] : memref<1x64xf32, #tpu.memory_space<vmem>>, vector<1x64xf32>
    %11 = vector.broadcast %10 : vector<1x64xf32> to vector<8x64xf32>
    %12 = arith.addf %9, %11 : vector<8x64xf32>
    %cst_11 = arith.constant 0.000000e+00 : f32
    %13 = vector.broadcast %cst_11 : f32 to vector<8x64xf32>
    %14 = arith.maximumf %12, %13 : vector<8x64xf32>
    %c0_12 = arith.constant 0 : index
    %c0_13 = arith.constant 0 : index
    %15 = vector.load %arg4[%c0_12, %c0_13] : memref<64x8xf32, #tpu.memory_space<vmem>>, vector<64x8xf32>
    %cst_14 = arith.constant dense<0.000000e+00> : vector<8x8xf32>
    %16 = tpu.matmul %14, %15, %cst_14 {dimension_numbers = #tpu.dot_dimension_numbers<[1], [0], [0], [1], [0, 0, 1, 1], [], []>} : vector<8x64xf32>, vector<64x8xf32>, vector<8x8xf32> -> vector<8x8xf32>
    %c0_15 = arith.constant 0 : index
    %c0_16 = arith.constant 0 : index
    %17 = vector.load %arg7[%c0_15, %c0_16] : memref<1x8xf32, #tpu.memory_space<vmem>>, vector<1x8xf32>
    %18 = vector.broadcast %17 : vector<1x8xf32> to vector<8x8xf32>
    %19 = arith.addf %16, %18 : vector<8x8xf32>
    %20 = math.tanh %19 : vector<8x8xf32>
    %c0_17 = arith.constant 0 : index
    %c0_18 = arith.constant 0 : index
    %21 = vector.load %arg8[%c0_17, %c0_18] : memref<8x8xf32, #tpu.memory_space<vmem>>, vector<8x8xf32>
    tpu.vector_store %arg8[%c0_17, %c0_18], %20 {strides = array<i32>} : memref<8x8xf32, #tpu.memory_space<vmem>>, vector<8x8xf32>,
    return
  }
  func.func @transform_0(%arg0: i32) -> (i32, i32) {
    %c0_i32 = arith.constant 0 : i32
    %c0_i32_0 = arith.constant 0 : i32
    return %arg0, %c0_i32 : i32, i32
  }
  func.func @transform_1(%arg0: i32) -> (i32, i32) {
    %c0_i32 = arith.constant 0 : i32
    %c0_i32_0 = arith.constant 0 : i32
    %c0_i32_1 = arith.constant 0 : i32
    return %c0_i32, %c0_i32_0 : i32, i32
  }
  func.func @transform_2(%arg0: i32) -> (i32, i32) {
    %c0_i32 = arith.constant 0 : i32
    %c0_i32_0 = arith.constant 0 : i32
    %c0_i32_1 = arith.constant 0 : i32
    return %c0_i32, %c0_i32_0 : i32, i32
  }
  func.func @transform_3(%arg0: i32) -> (i32, i32) {
    %c0_i32 = arith.constant 0 : i32
    %c0_i32_0 = arith.constant 0 : i32
    %c0_i32_1 = arith.constant 0 : i32
    return %c0_i32, %c0_i32_0 : i32, i32
  }
  func.func @transform_4(%arg0: i32) -> (i32, i32) {
    %c0_i32 = arith.constant 0 : i32
    %c0_i32_0 = arith.constant 0 : i32
    %c0_i32_1 = arith.constant 0 : i32
    return %c0_i32, %c0_i32_0 : i32, i32
  }
  func.func @transform_5(%arg0: i32) -> (i32, i32) {
    %c0_i32 = arith.constant 0 : i32
    %c0_i32_0 = arith.constant 0 : i32
    %c0_i32_1 = arith.constant 0 : i32
    return %c0_i32, %c0_i32_0 : i32, i32
  }
  func.func @transform_6(%arg0: i32) -> (i32, i32) {
    %c0_i32 = arith.constant 0 : i32
    %c0_i32_0 = arith.constant 0 : i32
    %c0_i32_1 = arith.constant 0 : i32
    return %c0_i32, %c0_i32_0 : i32, i32
  }
  func.func @transform_7(%arg0: i32) -> (i32, i32) {
    %c0_i32 = arith.constant 0 : i32
    %c0_i32_0 = arith.constant 0 : i32
    return %arg0, %c0_i32 : i32, i32
  }
}

</mosaic_0001>

<llo_original>
// kernel: tpu_custom_call.1
$region0: #{tpu_custom_call.1}
  #allocation0 [shape = 'u32[]', space=smem, size = 0x4, offset = 0x4, fixed_abs, tag = 'smem constant byte address 0x4 - core index']
  #allocation1 [shape = 'u32[144,128]{1,0:T(1,128)}', space=vmem, size = 0x12000, scoped, tag = 'internal scratch']
  %s0 = inlined_call_operand.vmem [shape: f32[2,16], index: 0, kind: input, shape index: {}]
  %s1 = inlined_call_operand.vmem [shape: f32[16,32], index: 1, kind: input, shape index: {}]
  %s2 = inlined_call_operand.vmem [shape: f32[32,64], index: 2, kind: input, shape index: {}]
  %s3 = inlined_call_operand.vmem [shape: f32[64,8], index: 3, kind: input, shape index: {}]
  %s4 = inlined_call_operand.vmem [shape: f32[1,32], index: 4, kind: input, shape index: {}]
  %s5 = inlined_call_operand.vmem [shape: f32[1,64], index: 5, kind: input, shape index: {}]
  %s6 = inlined_call_operand.vmem [shape: f32[1,8], index: 6, kind: input, shape index: {}]
  %s7 = inlined_call_operand.hbm [shape: f32[2,8], index: 7, kind: output, shape index: {}]
  %s8 = sld [smem:[#allocation0]]
  $region38: #{tpu_custom_call.1} parent=0
    _
  %s10 = ssub.s32 1, %s8
  %s11 = scalar_select 0, %s10, %s8
  $region1: #{tpu_custom_call.1} parent=0
    #allocation2 [shape = 'u8[4096]{0}', space=vmem, size = 0x1000, scoped, tag = 'output window, operand 0, single buffered']
    #allocation3 [shape = 's32[1]{0}', space=sflag, size = 0x4, scoped, tag = 'scoped memory for tpu_custom_call.1']
    %12 = vsyncpa [#allocation3], 0
    // Predicated region
    $region2: #{tpu_custom_call.1} parent=1 // pred_check
      _
    $region3: #{tpu_custom_call.1} parent=1 // pred_check_branch
      %14 = sbr.rel (0) target = $region5
    $region4: #{tpu_custom_call.1} parent=1 // pred_region
      _
    $region5: #{tpu_custom_call.1} parent=1 // pred_fallthru
      _
    // Predicated region
    $region6: #{tpu_custom_call.1} parent=1 // pred_check
      _
    $region7: #{tpu_custom_call.1} parent=1 // pred_check_branch
      %16 = sbr.rel (0) target = $region9
    $region8: #{tpu_custom_call.1} parent=1 // pred_region
      _
    $region9: #{tpu_custom_call.1} parent=1 // pred_fallthru
      _
    // Predicated region
    $region10: #{tpu_custom_call.1} parent=1 // pred_check
      _
    $region11: #{tpu_custom_call.1} parent=1 // pred_check_branch
      %18 = sbr.rel (0) target = $region13
    $region12: #{tpu_custom_call.1} parent=1 // pred_region
      _
    $region13: #{tpu_custom_call.1} parent=1 // pred_fallthru
      _
    // Predicated region
    $region14: #{tpu_custom_call.1} parent=1 // pred_check
      _
    $region15: #{tpu_custom_call.1} parent=1 // pred_check_branch
      %20 = sbr.rel (0) target = $region17
    $region16: #{tpu_custom_call.1} parent=1 // pred_region
      _
    $region17: #{tpu_custom_call.1} parent=1 // pred_fallthru
      _
    // Predicated region
    $region18: #{tpu_custom_call.1} parent=1 // pred_check
      _
    $region19: #{tpu_custom_call.1} parent=1 // pred_check_branch
      %22 = sbr.rel (0) target = $region21
    $region20: #{tpu_custom_call.1} parent=1 // pred_region
      _
    $region21: #{tpu_custom_call.1} parent=1 // pred_fallthru
      _
    // Predicated region
    $region22: #{tpu_custom_call.1} parent=1 // pred_check
      _
    $region23: #{tpu_custom_call.1} parent=1 // pred_check_branch
      %24 = sbr.rel (0) target = $region25
    $region24: #{tpu_custom_call.1} parent=1 // pred_region
      _
    $region25: #{tpu_custom_call.1} parent=1 // pred_fallthru
      _
    // Predicated region
    $region26: #{tpu_custom_call.1} parent=1 // pred_check
      _
    $region27: #{tpu_custom_call.1} parent=1 // pred_check_branch
      %26 = sbr.rel (0) target = $region29
    $region28: #{tpu_custom_call.1} parent=1 // pred_region
      _
    $region29: #{tpu_custom_call.1} parent=1 // pred_fallthru
      _
    %v27 = vld [vmem:[%s0] sm:$0xff]
    %v28 = vld [vmem:[%s1] sm:$0xff]
    %v29 = vld [vmem:[%s1 + $0x8] sm:$0xff]
    %v30 = vld [vmem:[%s4] sm:$0x1]
    %v32 = vlaneseq
    %v33 = vshrl.u32 %v32, 7
    %v34 = vsub.s32 0, %v33
    %v35 = vrot.slane %v30, %v34
    %vm37 = vcmask 130048
    %v39 = vsel %vm37, %v27, 0
    %41 = vmatprep.subr.mxu0 0.0
    %42 = vmatpush1.msra.mxu0 %v28
    %43 = vmatprep.subr.mxu0 0.0
    %44 = vmatpush1.msra.mxu0 %v29
    %45 = vmatprep.subr.mxu0 0.0
    %46 = vmatpush1.msra.mxu0 0.0
    %47 = vmatprep.subr.mxu0 0.0
    %48 = vmatpush1.msra.mxu0 0.0
    %49 = vmatprep.subr.mxu0 0.0
    %50 = vmatpush1.msra.mxu0 0.0
    %51 = vmatprep.subr.mxu0 0.0
    %52 = vmatpush1.msra.mxu0 0.0
    %53 = vmatprep.subr.mxu0 0.0
    %54 = vmatpush1.msra.mxu0 0.0
    %55 = vmatprep.subr.mxu0 0.0
    %56 = vmatpush1.msra.mxu0 0.0
    %57 = vmatprep.subr.mxu0 0.0
    %58 = vmatpush1.msra.mxu0 0.0
    %59 = vmatprep.subr.mxu0 0.0
    %60 = vmatpush1.msra.mxu0 0.0
    %61 = vmatprep.subr.mxu0 0.0
    %62 = vmatpush1.msra.mxu0 0.0
    %63 = vmatprep.subr.mxu0 0.0
    %64 = vmatpush1.msra.mxu0 0.0
    %65 = vmatprep.subr.mxu0 0.0
    %66 = vmatpush1.msra.mxu0 0.0
    %67 = vmatprep.subr.mxu0 0.0
    %68 = vmatpush1.msra.mxu0 0.0
    %69 = vmatprep.subr.mxu0 0.0
    %70 = vmatpush1.msra.mxu0 0.0
    %71 = vmatprep.subr.mxu0 0.0
    %72 = vmatpush1.msra.mxu0 0.0
    %73 = vmatprep.subr.mxu0 0.0
    %74 = vmatpush1.msra.mxu0 0.0
    %75 = vmatprep.subr.mxu0 0.0
    %76 = vmatpush1.msra.mxu0 0.0
    %77 = vmatprep.subr.mxu0 0.0
    %78 = vmatpush1.msra.mxu0 0.0
    %79 = vmatprep.subr.mxu0 0.0
    %80 = vmatpush1.msra.mxu0 0.0
    %81 = vmatprep.subr.mxu0 0.0
    %82 = vmatpush1.msra.mxu0 0.0
    %83 = vmatprep.subr.mxu0 0.0
    %84 = vmatpush1.msra.mxu0 0.0
    %85 = vmatprep.subr.mxu0 0.0
    %86 = vmatpush1.msra.mxu0 0.0
    %87 = vmatprep.subr.mxu0 0.0
    %88 = vmatpush1.msra.mxu0 0.0
    %89 = vmatprep.subr.mxu0 0.0
    %90 = vmatpush1.msra.mxu0 0.0
    %91 = vmatprep.subr.mxu0 0.0
    %92 = vmatpush1.msra.mxu0 0.0
    %93 = vmatprep.subr.mxu0 0.0
    %94 = vmatpush1.msra.mxu0 0.0
    %95 = vmatprep.subr.mxu0 0.0
    %96 = vmatpush1.msra.mxu0 0.0
    %97 = vmatprep.subr.mxu0 0.0
    %98 = vmatpush1.msra.mxu0 0.0
    %99 = vmatprep.subr.mxu0 0.0
    %100 = vmatpush1.msra.mxu0 0.0
    %101 = vmatprep.subr.mxu0 0.0
    %102 = vmatpush1.msra.mxu0 0.0
    %103 = vmatprep.subr.mxu0 0.0
    %104 = vmatpush1.msra.mxu0 0.0
    %105 = vmatprep.mubr.f32.mxu0 0.0
    %106 = vmatmul.mubr.f32.gmra.mrb[0].mxu0 %v39
    %v107 = vpop.f32.mrb[0].mxu0
    %v108 = vadd.f32 %v35, %v107
    %v109 = vpop.f32.mrb[0].mxu0
    %110 = vdwg.mxu0
    %v111 = vmax.f32 %v108, 0.0
    %v112 = vld [vmem:[%s2] sm:$0xff]
    %v113 = vld [vmem:[%s2 + $0x8] sm:$0xff]
    %v114 = vld [vmem:[%s2 + $0x10] sm:$0xff]
    %v115 = vld [vmem:[%s2 + $0x18] sm:$0xff]
    %v116 = vld [vmem:[%s5] sm:$0x1]
    %v118 = vlaneseq
    %v119 = vshrl.u32 %v118, 7
    %v120 = vsub.s32 0, %v119
    %v121 = vrot.slane %v116, %v120
    %vm123 = vcmask 261120
    %v125 = vsel %vm123, %v111, 0
    %127 = vmatprep.subr.mxu0 0.0
    %128 = vmatpush1.msra.mxu0 %v112
    %129 = vmatprep.subr.mxu0 0.0
    %130 = vmatpush1.msra.mxu0 %v113
    %131 = vmatprep.subr.mxu0 0.0
    %132 = vmatpush1.msra.mxu0 %v114
    %133 = vmatprep.subr.mxu0 0.0
    %134 = vmatpush1.msra.mxu0 %v115
    %135 = vmatprep.subr.mxu0 0.0
    %136 = vmatpush1.msra.mxu0 0.0
    %137 = vmatprep.subr.mxu0 0.0
    %138 = vmatpush1.msra.mxu0 0.0
    %139 = vmatprep.subr.mxu0 0.0
    %140 = vmatpush1.msra.mxu0 0.0
    %141 = vmatprep.subr.mxu0 0.0
    %142 = vmatpush1.msra.mxu0 0.0
    %143 = vmatprep.subr.mxu0 0.0
    %144 = vmatpush1.msra.mxu0 0.0
    %145 = vmatprep.subr.mxu0 0.0
    %146 = vmatpush1.msra.mxu0 0.0
    %147 = vmatprep.subr.mxu0 0.0
    %148 = vmatpush1.msra.mxu0 0.0
    %149 = vmatprep.subr.mxu0 0.0
    %150 = vmatpush1.msra.mxu0 0.0
    %151 = vmatprep.subr.mxu0 0.0
    %152 = vmatpush1.msra.mxu0 0.0
    %153 = vmatprep.subr.mxu0 0.0
    %154 = vmatpush1.msra.mxu0 0.0
    %155 = vmatprep.subr.mxu0 0.0
    %156 = vmatpush1.msra.mxu0 0.0
    %157 = vmatprep.subr.mxu0 0.0
    %158 = vmatpush1.msra.mxu0 0.0
    %159 = vmatprep.subr.mxu0 0.0
    %160 = vmatpush1.msra.mxu0 0.0
    %161 = vmatprep.subr.mxu0 0.0
    %162 = vmatpush1.msra.mxu0 0.0
    %163 = vmatprep.subr.mxu0 0.0
    %164 = vmatpush1.msra.mxu0 0.0
    %165 = vmatprep.subr.mxu0 0.0
    %166 = vmatpush1.msra.mxu0 0.0
    %167 = vmatprep.subr.mxu0 0.0
    %168 = vmatpush1.msra.mxu0 0.0
    %169 = vmatprep.subr.mxu0 0.0
    %170 = vmatpush1.msra.mxu0 0.0
    %171 = vmatprep.subr.mxu0 0.0
    %172 = vmatpush1.msra.mxu0 0.0
    %173 = vmatprep.subr.mxu0 0.0
    %174 = vmatpush1.msra.mxu0 0.0
    %175 = vmatprep.subr.mxu0 0.0
    %176 = vmatpush1.msra.mxu0 0.0
    %177 = vmatprep.subr.mxu0 0.0
    %178 = vmatpush1.msra.mxu0 0.0
    %179 = vmatprep.subr.mxu0 0.0
    %180 = vmatpush1.msra.mxu0 0.0
    %181 = vmatprep.subr.mxu0 0.0
    %182 = vmatpush1.msra.mxu0 0.0
    %183 = vmatprep.subr.mxu0 0.0
    %184 = vmatpush1.msra.mxu0 0.0
    %185 = vmatprep.subr.mxu0 0.0
    %186 = vmatpush1.msra.mxu0 0.0
    %187 = vmatprep.subr.mxu0 0.0
    %188 = vmatpush1.msra.mxu0 0.0
    %189 = vmatprep.subr.mxu0 0.0
    %190 = vmatpush1.msra.mxu0 0.0
    %191 = vmatprep.mubr.f32.mxu0 0.0
    %192 = vmatmul.mubr.f32.gmra.mrb[0].mxu0 %v125
    %v193 = vpop.f32.mrb[0].mxu0
    %v194 = vadd.f32 %v121, %v193
    %v195 = vpop.f32.mrb[0].mxu0
    %196 = vdwg.mxu0
    %v197 = vmax.f32 %v194, 0.0
    %v198 = vld [vmem:[%s3] sm:$0xff]
    %v199 = vld [vmem:[%s3 + $0x8] sm:$0xff]
    %v200 = vld [vmem:[%s3 + $0x10] sm:$0xff]
    %v201 = vld [vmem:[%s3 + $0x18] sm:$0xff]
    %v202 = vld [vmem:[%s3 + $0x20] sm:$0xff]
    %v203 = vld [vmem:[%s3 + $0x28] sm:$0xff]
    %v204 = vld [vmem:[%s3 + $0x30] sm:$0xff]
    %v205 = vld [vmem:[%s3 + $0x38] sm:$0xff]
    %v206 = vld [vmem:[%s6] sm:$0x1]
    %v208 = vlaneseq
    %v209 = vshrl.u32 %v208, 7
    %v210 = vsub.s32 0, %v209
    %v211 = vrot.slane %v206, %v210
    %vm213 = vcmask 523264
    %v215 = vsel %vm213, %v197, 0
    %217 = vmatprep.subr.mxu0 0.0
    %218 = vmatpush1.msra.mxu0 %v198
    %219 = vmatprep.subr.mxu0 0.0
    %220 = vmatpush1.msra.mxu0 %v199
    %221 = vmatprep.subr.mxu0 0.0
    %222 = vmatpush1.msra.mxu0 %v200
    %223 = vmatprep.subr.mxu0 0.0
    %224 = vmatpush1.msra.mxu0 %v201
    %225 = vmatprep.subr.mxu0 0.0
    %226 = vmatpush1.msra.mxu0 %v202
    %227 = vmatprep.subr.mxu0 0.0
    %228 = vmatpush1.msra.mxu0 %v203
    %229 = vmatprep.subr.mxu0 0.0
    %230 = vmatpush1.msra.mxu0 %v204
    %231 = vmatprep.subr.mxu0 0.0
    %232 = vmatpush1.msra.mxu0 %v205
    %233 = vmatprep.subr.mxu0 0.0
    %234 = vmatpush1.msra.mxu0 0.0
    %235 = vmatprep.subr.mxu0 0.0
    %236 = vmatpush1.msra.mxu0 0.0
    %237 = vmatprep.subr.mxu0 0.0
    %238 = vmatpush1.msra.mxu0 0.0
    %239 = vmatprep.subr.mxu0 0.0
    %240 = vmatpush1.msra.mxu0 0.0
    %241 = vmatprep.subr.mxu0 0.0
    %242 = vmatpush1.msra.mxu0 0.0
    %243 = vmatprep.subr.mxu0 0.0
    %244 = vmatpush1.msra.mxu0 0.0
    %245 = vmatprep.subr.mxu0 0.0
    %246 = vmatpush1.msra.mxu0 0.0
    %247 = vmatprep.subr.mxu0 0.0
    %248 = vmatpush1.msra.mxu0 0.0
    %249 = vmatprep.subr.mxu0 0.0
    %250 = vmatpush1.msra.mxu0 0.0
    %251 = vmatprep.subr.mxu0 0.0
    %252 = vmatpush1.msra.mxu0 0.0
    %253 = vmatprep.subr.mxu0 0.0
    %254 = vmatpush1.msra.mxu0 0.0
    %255 = vmatprep.subr.mxu0 0.0
    %256 = vmatpush1.msra.mxu0 0.0
    %257 = vmatprep.subr.mxu0 0.0
    %258 = vmatpush1.msra.mxu0 0.0
    %259 = vmatprep.subr.mxu0 0.0
    %260 = vmatpush1.msra.mxu0 0.0
    %261 = vmatprep.subr.mxu0 0.0
    %262 = vmatpush1.msra.mxu0 0.0
    %263 = vmatprep.subr.mxu0 0.0
    %264 = vmatpush1.msra.mxu0 0.0
    %265 = vmatprep.subr.mxu0 0.0
    %266 = vmatpush1.msra.mxu0 0.0
    %267 = vmatprep.subr.mxu0 0.0
    %268 = vmatpush1.msra.mxu0 0.0
    %269 = vmatprep.subr.mxu0 0.0
    %270 = vmatpush1.msra.mxu0 0.0
    %271 = vmatprep.subr.mxu0 0.0
    %272 = vmatpush1.msra.mxu0 0.0
    %273 = vmatprep.subr.mxu0 0.0
    %274 = vmatpush1.msra.mxu0 0.0
    %275 = vmatprep.subr.mxu0 0.0
    %276 = vmatpush1.msra.mxu0 0.0
    %277 = vmatprep.subr.mxu0 0.0
    %278 = vmatpush1.msra.mxu0 0.0
    %279 = vmatprep.subr.mxu0 0.0
    %280 = vmatpush1.msra.mxu0 0.0
    %281 = vmatprep.mubr.f32.mxu0 0.0
    %282 = vmatmul.mubr.f32.gmra.mrb[0].mxu0 %v215
    %v283 = vpop.f32.mrb[0].mxu0
    %v284 = vadd.f32 %v211, %v283
    %v285 = vpop.f32.mrb[0].mxu0
    %286 = vdwg.mxu0
    %v287 = vtanh.pop %v284
    %vm288 = vcmask 64512
    %289 = vst.msk [vmem:[#allocation2] sm:$0xff] %vm288, %v287
    // Predicated region
    $region30: #{tpu_custom_call.1} parent=1 // pred_check
      _
    $region31: #{tpu_custom_call.1} parent=1 // pred_check_branch
      %291 = sbr.rel (0) target = $region33
    $region32: #{tpu_custom_call.1} parent=1 // pred_region
      %s293 = ssub.s32 128, 32
      %294 = vsyncadd [#allocation3], %s293
      %s295 = sshll.u32 [#allocation2], 4
      %s296 = int_to_ptr.vmem [resolvable:$true] %s295
      %301 = dma.vmem_to_hbm [thread:$0]  %s296, 32, %s7, [#allocation3], 32, 32, 2
    $region33: #{tpu_custom_call.1} parent=1 // pred_fallthru
      _
    // Predicated region
    $region34: #{tpu_custom_call.1} parent=1 // pred_check
      _
    $region35: #{tpu_custom_call.1} parent=1 // pred_check_branch
      %303 = sbr.rel (0) target = $region37
    $region36: #{tpu_custom_call.1} parent=1 // pred_region
      %304 = dma.done [#allocation3], 128
    $region37: #{tpu_custom_call.1} parent=1 // pred_fallthru
      _
    %305 = vsyncpa [#allocation3], 1

</llo_original>
